<compile_context>
chip_gen: v5e
topology: v5e:2x2
jax: 0.10.0
libtpu: 0.0.40
codegen_flags: <defaults>
</compile_context>

<pallas_src>
import functools

import jax
import jax.numpy as jnp
from jax.experimental import pallas as pl
from jax.experimental.pallas import tpu as pltpu


HIDDEN = 50          # logical hidden width of the PyTorch module
H_PAD = 128          # lane-aligned padded hidden width
OUT_PAD = 128        # lane-aligned padded output width (real output is col 0)


def _round_up(n, m):
    return ((n + m - 1) // m) * m


# ---------------------------------------------------------------------------
# Kernel
# ---------------------------------------------------------------------------
def make_mlp_kernel(use_bf16: bool):
    """4-layer MLP on one batch tile. All matmuls hit the MXU with f32 acc."""
    mxu_dtype = jnp.bfloat16 if use_bf16 else jnp.float32

    def mlp_kernel(x_ref,
                   w1_ref, b1_ref,
                   w2_ref, b2_ref,
                   w3_ref, b3_ref,
                   w4_ref, b4_ref,
                   o_ref):
        def layer(h, w_ref, b_ref, relu):
            acc = jnp.dot(h.astype(mxu_dtype),
                          w_ref[...].astype(mxu_dtype),
                          preferred_element_type=jnp.float32)
            acc = acc + b_ref[...]            # bias add + ReLU stay in f32 (VPU)
            return jnp.maximum(acc, 0.0) if relu else acc

        h = layer(x_ref[...], w1_ref, b1_ref, relu=True)
        h = layer(h,          w2_ref, b2_ref, relu=True)
        h = layer(h,          w3_ref, b3_ref, relu=True)
        out = layer(h,        w4_ref, b4_ref, relu=False)
        o_ref[...] = out.astype(o_ref.dtype)

    return mlp_kernel


# ---------------------------------------------------------------------------
# Parameter handling
# ---------------------------------------------------------------------------
def init_params(key, input_size, hidden=HIDDEN):
    """Deterministic init mimicking torch.nn.Linear (U[-1/sqrt(fan_in), ...]).

    Weights are stored transposed relative to torch, i.e. (in, out); biases
    are (1, out) rows.  These are the *logical* (unpadded) parameters.
    """
    dims = [(input_size, hidden), (hidden, hidden), (hidden, hidden), (hidden, 1)]
    params = []
    for (fan_in, fan_out) in dims:
        key, kw, kb = jax.random.split(key, 3)
        bound = 1.0 / (fan_in ** 0.5)
        w = jax.random.uniform(kw, (fan_in, fan_out), jnp.float32, -bound, bound)
        b = jax.random.uniform(kb, (1, fan_out), jnp.float32, -bound, bound)
        params.extend([w, b])
    return tuple(params)


def _pad_params(params, input_size):
    """Zero-pad params to lane-aligned widths. Zero cols + zero bias keep the
    math identical through ReLU; zero rows ignore padded inputs/hiddens."""
    w1, b1, w2, b2, w3, b3, w4, b4 = params
    in_pad = _round_up(input_size, 128)

    def pad2(a, rows, cols):
        return jnp.pad(a, ((0, rows - a.shape[0]), (0, cols - a.shape[1])))

    padded = (
        pad2(w1, in_pad, H_PAD), pad2(b1, 1, H_PAD),
        pad2(w2, H_PAD, H_PAD),  pad2(b2, 1, H_PAD),
        pad2(w3, H_PAD, H_PAD),  pad2(b3, 1, H_PAD),
        pad2(w4, H_PAD, OUT_PAD), pad2(b4, 1, OUT_PAD),
    )
    return padded, in_pad


# ---------------------------------------------------------------------------
# Wrapper
# ---------------------------------------------------------------------------
@functools.partial(jax.jit, static_argnames=("tile_b", "use_bf16"))
def neural_network_forward(x, params, *, tile_b=256, use_bf16=False):
    """Run the 4-layer MLP forward pass with a batch-gridded Pallas kernel.

    x: (batch, input_size) float32   (fold any sample/particle dim into batch)
    params: (w1, b1, w2, b2, w3, b3, w4, b4), w_i (in,out), b_i (1,out)
    Returns (batch, 1) float32.
    """
    batch, input_size = x.shape
    padded_params, in_pad = _pad_params(params, input_size)

    # Batch tile: at least sublane-aligned (8), at most `tile_b`.
    tb = min(tile_b, _round_up(batch, 8))
    b_pad = _round_up(batch, tb)
    x_pad = jnp.pad(x, ((0, b_pad - batch), (0, in_pad - input_size)))

    grid = (pl.cdiv(b_pad, tb),)

    # x / out tiles move with the grid; weights & biases are VMEM-resident
    # (constant index_map -> DMA'd once, reused every grid step).
    in_specs = [pl.BlockSpec((tb, in_pad), lambda i: (i, 0))]
    for p in padded_params:
        in_specs.append(pl.BlockSpec(p.shape, lambda i: (0, 0)))
    out_spec = pl.BlockSpec((tb, OUT_PAD), lambda i: (i, 0))

    flops = 2 * b_pad * (in_pad * H_PAD + 2 * H_PAD * H_PAD + H_PAD * OUT_PAD)
    bytes_accessed = 4 * (x_pad.size
                          + sum(int(p.size) for p in padded_params)
                          + b_pad * OUT_PAD)

    out_padded = pl.pallas_call(
        make_mlp_kernel(use_bf16),
        out_shape=jax.ShapeDtypeStruct((b_pad, OUT_PAD), jnp.float32),
        grid_spec=pltpu.PrefetchScalarGridSpec(
            num_scalar_prefetch=0,
            grid=grid,
            in_specs=in_specs,
            out_specs=out_spec,
        ),
        compiler_params=pltpu.CompilerParams(
            dimension_semantics=("parallel",),   # megacore sharding on v7x
        ),
        cost_estimate=pl.CostEstimate(
            flops=flops, transcendentals=0, bytes_accessed=bytes_accessed),
    )(x_pad, *padded_params)

    # Strip batch padding and the 127 zero output lanes.
    return out_padded[:batch, :1]


def _reference_forward(x, params):
    w1, b1, w2, b2, w3, b3, w4, b4 = params
    h = jnp.maximum(x @ w1 + b1, 0.0)
    h = jnp.maximum(h @ w2 + b2, 0.0)
    h = jnp.maximum(h @ w3 + b3, 0.0)
    return h @ w4 + b4


# ---------------------------------------------------------------------------
# Demo / self-check
# ---------------------------------------------------------------------------
if __name__ == "__main__":
    key = jax.random.PRNGKey(0)

    # --- small case (matches the module's typical regression-input sizes) ---
    batch, input_size = 8, 32
    key, kx = jax.random.split(key)
    x_small = jax.random.normal(kx, (batch, input_size), jnp.float32)
    params = init_params(key, input_size)

    out_small = jax.block_until_ready(neural_network_forward(x_small, params))
    ref_small = _reference_forward(x_small, params)
    assert out_small.shape == (batch, 1), out_small.shape
    assert jnp.allclose(out_small, ref_small, atol=1e-5, rtol=1e-5), \
        "small-batch mismatch vs JAX reference"

    # --- batched case: exercises the multi-step grid + VMEM-resident weights
    # (this is the configuration the kernel is meant to run in, e.g. with the
    # Pyro posterior-sample dimension folded into batch) ---
    big_batch = 512
    key, kx2 = jax.random.split(key)
    x_big = jax.random.normal(kx2, (big_batch, input_size), jnp.float32)
    out_big = jax.block_until_ready(
        neural_network_forward(x_big, params, tile_b=128))
    ref_big = _reference_forward(x_big, params)
    assert out_big.shape == (big_batch, 1), out_big.shape
    assert jnp.allclose(out_big, ref_big, atol=1e-5, rtol=1e-5), \
        "big-batch mismatch vs JAX reference"

    print("KERNEL_OK")
</pallas_src>

<mosaic_0001>
module attributes {stable_mosaic.version = 11 : i64} {
  func.func @mlp_kernel(%arg0: i32, %arg1: memref<8x128xf32, #tpu.memory_space<vmem>>, %arg2: memref<128x128xf32, #tpu.memory_space<vmem>>, %arg3: memref<1x128xf32, #tpu.memory_space<vmem>>, %arg4: memref<128x128xf32, #tpu.memory_space<vmem>>, %arg5: memref<1x128xf32, #tpu.memory_space<vmem>>, %arg6: memref<128x128xf32, #tpu.memory_space<vmem>>, %arg7: memref<1x128xf32, #tpu.memory_space<vmem>>, %arg8: memref<128x128xf32, #tpu.memory_space<vmem>>, %arg9: memref<1x128xf32, #tpu.memory_space<vmem>>, %arg10: memref<8x128xf32, #tpu.memory_space<vmem>>) attributes {dimension_semantics = [#tpu.dimension_semantics<parallel>], iteration_bounds = array<i64: 1>, scalar_prefetch = 0 : i64, scratch_operands = 0 : i64, tpu.core_type = #tpu.core_type<tc>, window_params = [{transform_indices = @transform_0, window_bounds = array<i64: 8, 128>}, {pipeline_mode = #tpu.pipeline_mode<synchronous>, transform_indices = @transform_1, window_bounds = array<i64: 128, 128>}, {pipeline_mode = #tpu.pipeline_mode<synchronous>, transform_indices = @transform_2, window_bounds = array<i64: 1, 128>}, {pipeline_mode = #tpu.pipeline_mode<synchronous>, transform_indices = @transform_3, window_bounds = array<i64: 128, 128>}, {pipeline_mode = #tpu.pipeline_mode<synchronous>, transform_indices = @transform_4, window_bounds = array<i64: 1, 128>}, {pipeline_mode = #tpu.pipeline_mode<synchronous>, transform_indices = @transform_5, window_bounds = array<i64: 128, 128>}, {pipeline_mode = #tpu.pipeline_mode<synchronous>, transform_indices = @transform_6, window_bounds = array<i64: 1, 128>}, {pipeline_mode = #tpu.pipeline_mode<synchronous>, transform_indices = @transform_7, window_bounds = array<i64: 128, 128>}, {pipeline_mode = #tpu.pipeline_mode<synchronous>, transform_indices = @transform_8, window_bounds = array<i64: 1, 128>}, {transform_indices = @transform_9, window_bounds = array<i64: 8, 128>}]} {
    %c0 = arith.constant 0 : index
    %c0_0 = arith.constant 0 : index
    %0 = vector.load %arg1[%c0, %c0_0] : memref<8x128xf32, #tpu.memory_space<vmem>>, vector<8x128xf32>
    %c0_1 = arith.constant 0 : index
    %c0_2 = arith.constant 0 : index
    %1 = vector.load %arg2[%c0_1, %c0_2] : memref<128x128xf32, #tpu.memory_space<vmem>>, vector<128x128xf32>
    %cst = arith.constant dense<0.000000e+00> : vector<8x128xf32>
    %2 = tpu.matmul %0, %1, %cst {dimension_numbers = #tpu.dot_dimension_numbers<[1], [0], [0], [1], [0, 0, 1, 1], [], []>} : vector<8x128xf32>, vector<128x128xf32>, vector<8x128xf32> -> vector<8x128xf32>
    %c0_3 = arith.constant 0 : index
    %c0_4 = arith.constant 0 : index
    %3 = vector.load %arg3[%c0_3, %c0_4] : memref<1x128xf32, #tpu.memory_space<vmem>>, vector<1x128xf32>
    %4 = vector.broadcast %3 : vector<1x128xf32> to vector<8x128xf32>
    %5 = arith.addf %2, %4 : vector<8x128xf32>
    %cst_5 = arith.constant 0.000000e+00 : f32
    %6 = vector.broadcast %cst_5 : f32 to vector<8x128xf32>
    %7 = arith.maximumf %5, %6 : vector<8x128xf32>
    %c0_6 = arith.constant 0 : index
    %c0_7 = arith.constant 0 : index
    %8 = vector.load %arg4[%c0_6, %c0_7] : memref<128x128xf32, #tpu.memory_space<vmem>>, vector<128x128xf32>
    %cst_8 = arith.constant dense<0.000000e+00> : vector<8x128xf32>
    %9 = tpu.matmul %7, %8, %cst_8 {dimension_numbers = #tpu.dot_dimension_numbers<[1], [0], [0], [1], [0, 0, 1, 1], [], []>} : vector<8x128xf32>, vector<128x128xf32>, vector<8x128xf32> -> vector<8x128xf32>
    %c0_9 = arith.constant 0 : index
    %c0_10 = arith.constant 0 : index
    %10 = vector.load %arg5[%c0_9, %c0_10] : memref<1x128xf32, #tpu.memory_space<vmem>>, vector<1x128xf32>
    %11 = vector.broadcast %10 : vector<1x128xf32> to vector<8x128xf32>
    %12 = arith.addf %9, %11 : vector<8x128xf32>
    %cst_11 = arith.constant 0.000000e+00 : f32
    %13 = vector.broadcast %cst_11 : f32 to vector<8x128xf32>
    %14 = arith.maximumf %12, %13 : vector<8x128xf32>
    %c0_12 = arith.constant 0 : index
    %c0_13 = arith.constant 0 : index
    %15 = vector.load %arg6[%c0_12, %c0_13] : memref<128x128xf32, #tpu.memory_space<vmem>>, vector<128x128xf32>
    %cst_14 = arith.constant dense<0.000000e+00> : vector<8x128xf32>
    %16 = tpu.matmul %14, %15, %cst_14 {dimension_numbers = #tpu.dot_dimension_numbers<[1], [0], [0], [1], [0, 0, 1, 1], [], []>} : vector<8x128xf32>, vector<128x128xf32>, vector<8x128xf32> -> vector<8x128xf32>
    %c0_15 = arith.constant 0 : index
    %c0_16 = arith.constant 0 : index
    %17 = vector.load %arg7[%c0_15, %c0_16] : memref<1x128xf32, #tpu.memory_space<vmem>>, vector<1x128xf32>
    %18 = vector.broadcast %17 : vector<1x128xf32> to vector<8x128xf32>
    %19 = arith.addf %16, %18 : vector<8x128xf32>
    %cst_17 = arith.constant 0.000000e+00 : f32
    %20 = vector.broadcast %cst_17 : f32 to vector<8x128xf32>
    %21 = arith.maximumf %19, %20 : vector<8x128xf32>
    %c0_18 = arith.constant 0 : index
    %c0_19 = arith.constant 0 : index
    %22 = vector.load %arg8[%c0_18, %c0_19] : memref<128x128xf32, #tpu.memory_space<vmem>>, vector<128x128xf32>
    %cst_20 = arith.constant dense<0.000000e+00> : vector<8x128xf32>
    %23 = tpu.matmul %21, %22, %cst_20 {dimension_numbers = #tpu.dot_dimension_numbers<[1], [0], [0], [1], [0, 0, 1, 1], [], []>} : vector<8x128xf32>, vector<128x128xf32>, vector<8x128xf32> -> vector<8x128xf32>
    %c0_21 = arith.constant 0 : index
    %c0_22 = arith.constant 0 : index
    %24 = vector.load %arg9[%c0_21, %c0_22] : memref<1x128xf32, #tpu.memory_space<vmem>>, vector<1x128xf32>
    %25 = vector.broadcast %24 : vector<1x128xf32> to vector<8x128xf32>
    %26 = arith.addf %23, %25 : vector<8x128xf32>
    %c0_23 = arith.constant 0 : index
    %c0_24 = arith.constant 0 : index
    %27 = vector.load %arg10[%c0_23, %c0_24] : memref<8x128xf32, #tpu.memory_space<vmem>>, vector<8x128xf32>
    tpu.vector_store %arg10[%c0_23, %c0_24], %26 {strides = array<i32>} : memref<8x128xf32, #tpu.memory_space<vmem>>, vector<8x128xf32>,
    return
  }
  func.func @transform_0(%arg0: i32) -> (i32, i32) {
    %c0_i32 = arith.constant 0 : i32
    %c0_i32_0 = arith.constant 0 : i32
    return %arg0, %c0_i32 : i32, i32
  }
  func.func @transform_1(%arg0: i32) -> (i32, i32) {
    %c0_i32 = arith.constant 0 : i32
    %c0_i32_0 = arith.constant 0 : i32
    %c0_i32_1 = arith.constant 0 : i32
    return %c0_i32, %c0_i32_0 : i32, i32
  }
  func.func @transform_2(%arg0: i32) -> (i32, i32) {
    %c0_i32 = arith.constant 0 : i32
    %c0_i32_0 = arith.constant 0 : i32
    %c0_i32_1 = arith.constant 0 : i32
    return %c0_i32, %c0_i32_0 : i32, i32
  }
  func.func @transform_3(%arg0: i32) -> (i32, i32) {
    %c0_i32 = arith.constant 0 : i32
    %c0_i32_0 = arith.constant 0 : i32
    %c0_i32_1 = arith.constant 0 : i32
    return %c0_i32, %c0_i32_0 : i32, i32
  }
  func.func @transform_4(%arg0: i32) -> (i32, i32) {
    %c0_i32 = arith.constant 0 : i32
    %c0_i32_0 = arith.constant 0 : i32
    %c0_i32_1 = arith.constant 0 : i32
    return %c0_i32, %c0_i32_0 : i32, i32
  }
  func.func @transform_5(%arg0: i32) -> (i32, i32) {
    %c0_i32 = arith.constant 0 : i32
    %c0_i32_0 = arith.constant 0 : i32
    %c0_i32_1 = arith.constant 0 : i32
    return %c0_i32, %c0_i32_0 : i32, i32
  }
  func.func @transform_6(%arg0: i32) -> (i32, i32) {
    %c0_i32 = arith.constant 0 : i32
    %c0_i32_0 = arith.constant 0 : i32
    %c0_i32_1 = arith.constant 0 : i32
    return %c0_i32, %c0_i32_0 : i32, i32
  }
  func.func @transform_7(%arg0: i32) -> (i32, i32) {
    %c0_i32 = arith.constant 0 : i32
    %c0_i32_0 = arith.constant 0 : i32
    %c0_i32_1 = arith.constant 0 : i32
    return %c0_i32, %c0_i32_0 : i32, i32
  }
  func.func @transform_8(%arg0: i32) -> (i32, i32) {
    %c0_i32 = arith.constant 0 : i32
    %c0_i32_0 = arith.constant 0 : i32
    %c0_i32_1 = arith.constant 0 : i32
    return %c0_i32, %c0_i32_0 : i32, i32
  }
  func.func @transform_9(%arg0: i32) -> (i32, i32) {
    %c0_i32 = arith.constant 0 : i32
    %c0_i32_0 = arith.constant 0 : i32
    return %arg0, %c0_i32 : i32, i32
  }
}

</mosaic_0001>

<llo_original>
// kernel: neural_network_forward.1
$region0: #{neural_network_forward.1}
  #allocation0 [shape = 'u32[]', space=smem, size = 0x4, offset = 0x4, fixed_abs, tag = 'smem constant byte address 0x4 - core index']
  #allocation1 [shape = 'u32[72,128]{1,0:T(1,128)}', space=vmem, size = 0x9000, scoped, tag = 'internal scratch']
  %s0 = inlined_call_operand.vmem [shape: f32[8,128], index: 0, kind: input, shape index: {}]
  %s1 = inlined_call_operand.vmem [shape: f32[128,128], index: 1, kind: input, shape index: {}]
  %s2 = inlined_call_operand.vmem [shape: f32[1,128], index: 2, kind: input, shape index: {}]
  %s3 = inlined_call_operand.vmem [shape: f32[128,128], index: 3, kind: input, shape index: {}]
  %s4 = inlined_call_operand.vmem [shape: f32[1,128], index: 4, kind: input, shape index: {}]
  %s5 = inlined_call_operand.vmem [shape: f32[128,128], index: 5, kind: input, shape index: {}]
  %s6 = inlined_call_operand.vmem [shape: f32[1,128], index: 6, kind: input, shape index: {}]
  %s7 = inlined_call_operand.vmem [shape: f32[128,128], index: 7, kind: input, shape index: {}]
  %s8 = inlined_call_operand.vmem [shape: f32[1,128], index: 8, kind: input, shape index: {}]
  %s9 = inlined_call_operand.vmem [shape: f32[8,128], index: 9, kind: output, shape index: {}]
  %s10 = sld [smem:[#allocation0]]
  $region46: #{neural_network_forward.1} parent=0
    _
  %s12 = ssub.s32 1, %s10
  %s13 = scalar_select 0, %s12, %s10
  // Predicated region
  $region2: #{neural_network_forward.1} parent=0 // pred_check
    _
  $region3: #{neural_network_forward.1} parent=0 // pred_check_branch
    %15 = sbr.rel (0) target = $region5
  $region4: #{neural_network_forward.1} parent=0 // pred_region
    _
  $region5: #{neural_network_forward.1} parent=0 // pred_fallthru
    _
  // Predicated region
  $region6: #{neural_network_forward.1} parent=0 // pred_check
    _
  $region7: #{neural_network_forward.1} parent=0 // pred_check_branch
    %17 = sbr.rel (0) target = $region9
  $region8: #{neural_network_forward.1} parent=0 // pred_region
    _
  $region9: #{neural_network_forward.1} parent=0 // pred_fallthru
    _
  // Predicated region
  $region10: #{neural_network_forward.1} parent=0 // pred_check
    _
  $region11: #{neural_network_forward.1} parent=0 // pred_check_branch
    %19 = sbr.rel (0) target = $region13
  $region12: #{neural_network_forward.1} parent=0 // pred_region
    _
  $region13: #{neural_network_forward.1} parent=0 // pred_fallthru
    _
  // Predicated region
  $region14: #{neural_network_forward.1} parent=0 // pred_check
    _
  $region15: #{neural_network_forward.1} parent=0 // pred_check_branch
    %21 = sbr.rel (0) target = $region17
  $region16: #{neural_network_forward.1} parent=0 // pred_region
    _
  $region17: #{neural_network_forward.1} parent=0 // pred_fallthru
    _
  // Predicated region
  $region18: #{neural_network_forward.1} parent=0 // pred_check
    _
  $region19: #{neural_network_forward.1} parent=0 // pred_check_branch
    %23 = sbr.rel (0) target = $region21
  $region20: #{neural_network_forward.1} parent=0 // pred_region
    _
  $region21: #{neural_network_forward.1} parent=0 // pred_fallthru
    _
  // Predicated region
  $region22: #{neural_network_forward.1} parent=0 // pred_check
    _
  $region23: #{neural_network_forward.1} parent=0 // pred_check_branch
    %25 = sbr.rel (0) target = $region25
  $region24: #{neural_network_forward.1} parent=0 // pred_region
    _
  $region25: #{neural_network_forward.1} parent=0 // pred_fallthru
    _
  // Predicated region
  $region26: #{neural_network_forward.1} parent=0 // pred_check
    _
  $region27: #{neural_network_forward.1} parent=0 // pred_check_branch
    %27 = sbr.rel (0) target = $region29
  $region28: #{neural_network_forward.1} parent=0 // pred_region
    _
  $region29: #{neural_network_forward.1} parent=0 // pred_fallthru
    _
  // Predicated region
  $region30: #{neural_network_forward.1} parent=0 // pred_check
    _
  $region31: #{neural_network_forward.1} parent=0 // pred_check_branch
    %29 = sbr.rel (0) target = $region33
  $region32: #{neural_network_forward.1} parent=0 // pred_region
    _
  $region33: #{neural_network_forward.1} parent=0 // pred_fallthru
    _
  // Predicated region
  $region34: #{neural_network_forward.1} parent=0 // pred_check
    _
  $region35: #{neural_network_forward.1} parent=0 // pred_check_branch
    %31 = sbr.rel (0) target = $region37
  $region36: #{neural_network_forward.1} parent=0 // pred_region
    _
  $region37: #{neural_network_forward.1} parent=0 // pred_fallthru
    _
  %v32 = vld [vmem:[%s0] sm:$0xff]
  %v33 = vld [vmem:[%s1] sm:$0xff]
  %v34 = vld [vmem:[%s1 + $0x8] sm:$0xff]
  %v35 = vld [vmem:[%s1 + $0x10] sm:$0xff]
  %v36 = vld [vmem:[%s1 + $0x18] sm:$0xff]
  %v37 = vld [vmem:[%s1 + $0x20] sm:$0xff]
  %v38 = vld [vmem:[%s1 + $0x28] sm:$0xff]
  %v39 = vld [vmem:[%s1 + $0x30] sm:$0xff]
  %v40 = vld [vmem:[%s1 + $0x38] sm:$0xff]
  %v41 = vld [vmem:[%s1 + $0x40] sm:$0xff]
  %v42 = vld [vmem:[%s1 + $0x48] sm:$0xff]
  %v43 = vld [vmem:[%s1 + $0x50] sm:$0xff]
  %v44 = vld [vmem:[%s1 + $0x58] sm:$0xff]
  %v45 = vld [vmem:[%s1 + $0x60] sm:$0xff]
  %v46 = vld [vmem:[%s1 + $0x68] sm:$0xff]
  %v47 = vld [vmem:[%s1 + $0x70] sm:$0xff]
  %v48 = vld [vmem:[%s1 + $0x78] sm:$0xff]
  %v49 = vld [vmem:[%s2] sm:$0x1]
  %v51 = vperm.slane %v49, 0
  %53 = vmatpush.msra.mxu0 %v48
  %54 = vmatpush.msra.mxu0 %v47
  %55 = vmatpush.msra.mxu0 %v46
  %56 = vmatpush.msra.mxu0 %v45
  %57 = vmatpush.msra.mxu0 %v44
  %58 = vmatpush.msra.mxu0 %v43
  %59 = vmatpush.msra.mxu0 %v42
  %60 = vmatpush.msra.mxu0 %v41
  %61 = vmatpush.msra.mxu0 %v40
  %62 = vmatpush.msra.mxu0 %v39
  %63 = vmatpush.msra.mxu0 %v38
  %64 = vmatpush.msra.mxu0 %v37
  %65 = vmatpush.msra.mxu0 %v36
  %66 = vmatpush.msra.mxu0 %v35
  %67 = vmatpush.msra.mxu0 %v34
  %68 = vmatpush.msra.mxu0 %v33
  %69 = vmatmul.f32.gmra.mxu0 %v32
  %v70 = vpop.f32.mrf.mxu0
  %v71 = vadd.f32 %v51, %v70
  %72 = vdwg.mxu0
  %v73 = vmax.f32 %v71, 0.0
  %v74 = vld [vmem:[%s3] sm:$0xff]
  %v75 = vld [vmem:[%s3 + $0x8] sm:$0xff]
  %v76 = vld [vmem:[%s3 + $0x10] sm:$0xff]
  %v77 = vld [vmem:[%s3 + $0x18] sm:$0xff]
  %v78 = vld [vmem:[%s3 + $0x20] sm:$0xff]
  %v79 = vld [vmem:[%s3 + $0x28] sm:$0xff]
  %v80 = vld [vmem:[%s3 + $0x30] sm:$0xff]
  %v81 = vld [vmem:[%s3 + $0x38] sm:$0xff]
  %v82 = vld [vmem:[%s3 + $0x40] sm:$0xff]
  %v83 = vld [vmem:[%s3 + $0x48] sm:$0xff]
  %v84 = vld [vmem:[%s3 + $0x50] sm:$0xff]
  %v85 = vld [vmem:[%s3 + $0x58] sm:$0xff]
  %v86 = vld [vmem:[%s3 + $0x60] sm:$0xff]
  %v87 = vld [vmem:[%s3 + $0x68] sm:$0xff]
  %v88 = vld [vmem:[%s3 + $0x70] sm:$0xff]
  %v89 = vld [vmem:[%s3 + $0x78] sm:$0xff]
  %v90 = vld [vmem:[%s4] sm:$0x1]
  %v92 = vperm.slane %v90, 0
  %94 = vmatpush.msra.mxu0 %v89
  %95 = vmatpush.msra.mxu0 %v88
  %96 = vmatpush.msra.mxu0 %v87
  %97 = vmatpush.msra.mxu0 %v86
  %98 = vmatpush.msra.mxu0 %v85
  %99 = vmatpush.msra.mxu0 %v84
  %100 = vmatpush.msra.mxu0 %v83
  %101 = vmatpush.msra.mxu0 %v82
  %102 = vmatpush.msra.mxu0 %v81
  %103 = vmatpush.msra.mxu0 %v80
  %104 = vmatpush.msra.mxu0 %v79
  %105 = vmatpush.msra.mxu0 %v78
  %106 = vmatpush.msra.mxu0 %v77
  %107 = vmatpush.msra.mxu0 %v76
  %108 = vmatpush.msra.mxu0 %v75
  %109 = vmatpush.msra.mxu0 %v74
  %110 = vmatmul.f32.gmra.mxu0 %v73
  %v111 = vpop.f32.mrf.mxu0
  %v112 = vadd.f32 %v92, %v111
  %113 = vdwg.mxu0
  %v114 = vmax.f32 %v112, 0.0
  %v115 = vld [vmem:[%s5] sm:$0xff]
  %v116 = vld [vmem:[%s5 + $0x8] sm:$0xff]
  %v117 = vld [vmem:[%s5 + $0x10] sm:$0xff]
  %v118 = vld [vmem:[%s5 + $0x18] sm:$0xff]
  %v119 = vld [vmem:[%s5 + $0x20] sm:$0xff]
  %v120 = vld [vmem:[%s5 + $0x28] sm:$0xff]
  %v121 = vld [vmem:[%s5 + $0x30] sm:$0xff]
  %v122 = vld [vmem:[%s5 + $0x38] sm:$0xff]
  %v123 = vld [vmem:[%s5 + $0x40] sm:$0xff]
  %v124 = vld [vmem:[%s5 + $0x48] sm:$0xff]
  %v125 = vld [vmem:[%s5 + $0x50] sm:$0xff]
  %v126 = vld [vmem:[%s5 + $0x58] sm:$0xff]
  %v127 = vld [vmem:[%s5 + $0x60] sm:$0xff]
  %v128 = vld [vmem:[%s5 + $0x68] sm:$0xff]
  %v129 = vld [vmem:[%s5 + $0x70] sm:$0xff]
  %v130 = vld [vmem:[%s5 + $0x78] sm:$0xff]
  %v131 = vld [vmem:[%s6] sm:$0x1]
  %v133 = vperm.slane %v131, 0
  %135 = vmatpush.msra.mxu0 %v130
  %136 = vmatpush.msra.mxu0 %v129
  %137 = vmatpush.msra.mxu0 %v128
  %138 = vmatpush.msra.mxu0 %v127
  %139 = vmatpush.msra.mxu0 %v126
  %140 = vmatpush.msra.mxu0 %v125
  %141 = vmatpush.msra.mxu0 %v124
  %142 = vmatpush.msra.mxu0 %v123
  %143 = vmatpush.msra.mxu0 %v122
  %144 = vmatpush.msra.mxu0 %v121
  %145 = vmatpush.msra.mxu0 %v120
  %146 = vmatpush.msra.mxu0 %v119
  %147 = vmatpush.msra.mxu0 %v118
  %148 = vmatpush.msra.mxu0 %v117
  %149 = vmatpush.msra.mxu0 %v116
  %150 = vmatpush.msra.mxu0 %v115
  %151 = vmatmul.f32.gmra.mxu0 %v114
  %v152 = vpop.f32.mrf.mxu0
  %v153 = vadd.f32 %v133, %v152
  %154 = vdwg.mxu0
  %v155 = vmax.f32 %v153, 0.0
  %v156 = vld [vmem:[%s7] sm:$0xff]
  %v157 = vld [vmem:[%s7 + $0x8] sm:$0xff]
  %v158 = vld [vmem:[%s7 + $0x10] sm:$0xff]
  %v159 = vld [vmem:[%s7 + $0x18] sm:$0xff]
  %v160 = vld [vmem:[%s7 + $0x20] sm:$0xff]
  %v161 = vld [vmem:[%s7 + $0x28] sm:$0xff]
  %v162 = vld [vmem:[%s7 + $0x30] sm:$0xff]
  %v163 = vld [vmem:[%s7 + $0x38] sm:$0xff]
  %v164 = vld [vmem:[%s7 + $0x40] sm:$0xff]
  %v165 = vld [vmem:[%s7 + $0x48] sm:$0xff]
  %v166 = vld [vmem:[%s7 + $0x50] sm:$0xff]
  %v167 = vld [vmem:[%s7 + $0x58] sm:$0xff]
  %v168 = vld [vmem:[%s7 + $0x60] sm:$0xff]
  %v169 = vld [vmem:[%s7 + $0x68] sm:$0xff]
  %v170 = vld [vmem:[%s7 + $0x70] sm:$0xff]
  %v171 = vld [vmem:[%s7 + $0x78] sm:$0xff]
  %v172 = vld [vmem:[%s8] sm:$0x1]
  %v174 = vperm.slane %v172, 0
  %176 = vmatpush.msra.mxu0 %v171
  %177 = vmatpush.msra.mxu0 %v170
  %178 = vmatpush.msra.mxu0 %v169
  %179 = vmatpush.msra.mxu0 %v168
  %180 = vmatpush.msra.mxu0 %v167
  %181 = vmatpush.msra.mxu0 %v166
  %182 = vmatpush.msra.mxu0 %v165
  %183 = vmatpush.msra.mxu0 %v164
  %184 = vmatpush.msra.mxu0 %v163
  %185 = vmatpush.msra.mxu0 %v162
  %186 = vmatpush.msra.mxu0 %v161
  %187 = vmatpush.msra.mxu0 %v160
  %188 = vmatpush.msra.mxu0 %v159
  %189 = vmatpush.msra.mxu0 %v158
  %190 = vmatpush.msra.mxu0 %v157
  %191 = vmatpush.msra.mxu0 %v156
  %192 = vmatmul.f32.gmra.mxu0 %v155
  %v193 = vpop.f32.mrf.mxu0
  %v194 = vadd.f32 %v174, %v193
  %195 = vdwg.mxu0
  %196 = vst [vmem:[%s9] sm:$0xff] %v194
  // Predicated region
  $region38: #{neural_network_forward.1} parent=0 // pred_check
    _
  $region39: #{neural_network_forward.1} parent=0 // pred_check_branch
    %198 = sbr.rel (0) target = $region41
  $region40: #{neural_network_forward.1} parent=0 // pred_region
    _
  $region41: #{neural_network_forward.1} parent=0 // pred_fallthru
    _
  // Predicated region
  $region42: #{neural_network_forward.1} parent=0 // pred_check
    _
  $region43: #{neural_network_forward.1} parent=0 // pred_check_branch
    %200 = sbr.rel (0) target = $region45
  $region44: #{neural_network_forward.1} parent=0 // pred_region
    _
  $region45: #{neural_network_forward.1} parent=0 // pred_fallthru
    _

</llo_original>
